<compile_context>
chip_gen: v7x
topology: tpu7x:2x2x1
jax: 0.10.0
libtpu: 0.0.40
codegen_flags: <defaults>
</compile_context>

<pallas_src>
import functools

import jax
import jax.numpy as jnp
from jax.experimental import pallas as pl
from jax.experimental.pallas import tpu as pltpu


# ------------------------ fused Linear + Conv kernel ----------------------- #
def fused_kernel(x_ref, lw_ref, cw_ref, o_ref, *, n_batch, c_in, height, k_h):
    # x_ref : (N*C*H, W)                 flattened NCHW input (Linear acts on W)
    # lw_ref: (W+1, W)                   [lin_w^T ; lin_b] packed (bias row last)
    # cw_ref: (Cout, Cin*KH*W + 1, Wo)   banded conv weight + bias row, per co
    # o_ref : (N, Cout, Ho, Wo)          NCHW output, written directly
    rows, w_in = x_ref.shape
    h_out = height - k_h + 1
    c_out = o_ref.shape[1]

    # Ones column: folds both biases into the matmuls (built once, reused).
    ones = jnp.ones((rows, 1), jnp.float32)

    # ---- Linear(10, 10): one MXU matmul over all N*C*H rows, bias folded. ----
    xa = jnp.concatenate([x_ref[...], ones], axis=1)            # (rows, W+1)
    y = jnp.dot(xa, lw_ref[...], preferred_element_type=jnp.float32)  # (rows, W)
    # y[(n*C + ci)*H + h, w] == linear_out[n, ci, h, w]; stays in VMEM/vregs.

    # ---- Hoisted row shifts for the im2col. ----
    # rot_up(a, k)[r] == a[(r + k) mod rows].  Only k = 1, 2 need a real
    # sublane relayout; the ci*H (= multiples of 16) rotations are tile-aligned
    # vreg renumbering.  Wrapped rows are never read by valid output rows.
    def rot_up(a, k):
        if k == 0:
            return a
        return jnp.concatenate([a[k:], a[:k]], axis=0)

    y_dh = [rot_up(y, dh) for dh in range(k_h)]                 # 2 relayouts

    # lhs[r, (ci*KH + dh)*W + w] = y[r + ci*H + dh, w]; valid rows are
    # r = n*C*H + ho.  Last column is ones -> conv bias row of the band.
    pieces = [rot_up(y_dh[dh], ci * height)
              for ci in range(c_in) for dh in range(k_h)]
    pieces.append(ones)
    lhs = jnp.concatenate(pieces, axis=1)                       # (rows, C*KH*W+1)

    # ---- Conv2d(3, 3, 3) valid: one banded MXU matmul per output channel. ----
    for co in range(c_out):
        res = jnp.dot(lhs, cw_ref[co],
                      preferred_element_type=jnp.float32)       # (rows, Wo)
        for n in range(n_batch):
            base = n * c_in * height                            # multiple of 16
            o_ref[n, co, :, :] = res[base:base + h_out, :]      # aligned slice


# ------------------------------- forward ----------------------------------- #
def simple_net_forward(x, prepared):
    """x: (N, C, H, W) float32 NCHW.  prepared: output of prepare_params()."""
    n, c, h, w = x.shape
    lin_pack = prepared["lin_pack"]                             # (W+1, W)
    conv_pack = prepared["conv_pack"]                           # (Cout, C*KH*W+1, Wo)
    c_out, band_rows_p1, w_out = conv_pack.shape
    k_h = (band_rows_p1 - 1) // (c * w)
    h_out = h - k_h + 1

    x_flat = x.reshape(n * c * h, w)        # contiguous NCHW -> free reshape
    rows = n * c * h

    kernel = functools.partial(
        fused_kernel, n_batch=n, c_in=c, height=h, k_h=k_h)

    flops = 2 * (rows * (w + 1) * w + c_out * rows * band_rows_p1 * w_out)
    bytes_accessed = 4 * (x_flat.size + lin_pack.size + conv_pack.size
                          + n * c_out * h_out * w_out)

    # Output is produced directly in NCHW; no wrapper transpose needed.
    return pl.pallas_call(
        kernel,
        out_shape=jax.ShapeDtypeStruct((n, c_out, h_out, w_out), jnp.float32),
        grid=(1,),  # single grid step: whole working set (<50 KiB) fits in VMEM
        in_specs=[
            pl.BlockSpec((rows, w), lambda i: (0, 0)),
            pl.BlockSpec((w + 1, w), lambda i: (0, 0)),
            pl.BlockSpec((c_out, band_rows_p1, w_out), lambda i: (0, 0, 0)),
        ],
        out_specs=pl.BlockSpec((n, c_out, h_out, w_out),
                               lambda i: (0, 0, 0, 0)),
        compiler_params=pltpu.CompilerParams(
            dimension_semantics=("arbitrary",)),
        cost_estimate=pl.CostEstimate(flops=flops, transcendentals=0,
                                      bytes_accessed=bytes_accessed),
    )(x_flat, lin_pack, conv_pack)


# ------------------------------- parameters -------------------------------- #
def init_params(key):
    """PyTorch-layout parameters (lin_w: (out,in); conv_w: OIHW)."""
    k1, k2, k3, k4 = jax.random.split(key, 4)
    lin_bound = 1.0 / jnp.sqrt(10.0)
    conv_bound = 1.0 / jnp.sqrt(3.0 * 3 * 3)
    return {
        "lin_w": jax.random.uniform(k1, (10, 10), jnp.float32,
                                    -lin_bound, lin_bound),     # (out, in)
        "lin_b": jax.random.uniform(k2, (10,), jnp.float32,
                                    -lin_bound, lin_bound),
        "conv_w": jax.random.uniform(k3, (3, 3, 3, 3), jnp.float32,
                                     -conv_bound, conv_bound),  # OIHW
        "conv_b": jax.random.uniform(k4, (3,), jnp.float32,
                                     -conv_bound, conv_bound),
    }


def prepare_params(params):
    """One-time layout prep: pack weights + biases into two DMA buffers.

    lin_pack  = [lin_w^T ; lin_b]                                  (W+1, W)
    conv_pack[co, (ci*KH + dh)*W + w, ow] = conv_w[co, ci, dh, w - ow]
      (zero where w - ow is outside [0, KW)), with an extra last row holding
      conv_b[co] so the kernel's ones-column folds the bias into the matmul.
    """
    lin_w, lin_b = params["lin_w"], params["lin_b"]
    conv_w, conv_b = params["conv_w"], params["conv_b"]
    c_out, c_in, k_h, k_w = conv_w.shape
    w_in = lin_w.shape[1]                   # width seen by the conv (= 10)
    w_out = w_in - k_w + 1

    lin_pack = jnp.concatenate([lin_w.T, lin_b.reshape(1, -1)], axis=0)

    w_idx = jnp.arange(w_in)[:, None]       # (W, 1)
    ow_idx = jnp.arange(w_out)[None, :]     # (1, Wo)
    tap = w_idx - ow_idx                    # (W, Wo): kw index used by (w, ow)
    valid = ((tap >= 0) & (tap < k_w)).astype(conv_w.dtype)
    band = conv_w[:, :, :, jnp.clip(tap, 0, k_w - 1)]       # (Cout,Cin,KH,W,Wo)
    band = band * valid[None, None, None]
    band = band.reshape(c_out, c_in * k_h * w_in, w_out)    # (Cout, C*KH*W, Wo)
    bias_row = jnp.broadcast_to(conv_b[:, None, None], (c_out, 1, w_out))
    conv_pack = jnp.concatenate([band, bias_row], axis=1)   # (Cout, C*KH*W+1, Wo)

    return {"lin_pack": lin_pack, "conv_pack": conv_pack}


if __name__ == "__main__":
    key = jax.random.PRNGKey(0)
    kp, kx = jax.random.split(key)
    params = init_params(kp)
    prepared = prepare_params(params)

    # N=2, C=3 (Conv2d in-channels), H=16, W=10 (Linear in-features), NCHW.
    x = jax.random.normal(kx, (2, 3, 16, 10), jnp.float32)

    out = simple_net_forward(x, prepared)
    jax.block_until_ready(out)

    # Cross-check against a plain-JAX reference of the PyTorch module.
    y_ref = x @ params["lin_w"].T + params["lin_b"]
    ref = jax.lax.conv_general_dilated(
        y_ref, params["conv_w"], window_strides=(1, 1), padding="VALID",
        dimension_numbers=("NCHW", "OIHW", "NCHW"),
    ) + params["conv_b"].reshape(1, 3, 1, 1)
    assert out.shape == (2, 3, 14, 8), out.shape
    assert jnp.allclose(out, ref, atol=1e-3, rtol=1e-3), float(
        jnp.max(jnp.abs(out - ref)))

    print("KERNEL_OK")
</pallas_src>

<mosaic_0001>
module attributes {stable_mosaic.version = 11 : i64} {
  func.func @fused_kernel(%arg0: i32, %arg1: memref<96x10xf32, #tpu.memory_space<vmem>>, %arg2: memref<11x10xf32, #tpu.memory_space<vmem>>, %arg3: memref<3x91x8xf32, #tpu.memory_space<vmem>>, %arg4: memref<2x3x14x8xf32, #tpu.memory_space<vmem>>) attributes {dimension_semantics = [#tpu.dimension_semantics<arbitrary>], iteration_bounds = array<i64: 1>, scalar_prefetch = 0 : i64, scratch_operands = 0 : i64, tpu.core_type = #tpu.core_type<tc>, window_params = [{pipeline_mode = #tpu.pipeline_mode<synchronous>, transform_indices = @transform_0, window_bounds = array<i64: 96, 10>}, {pipeline_mode = #tpu.pipeline_mode<synchronous>, transform_indices = @transform_1, window_bounds = array<i64: 11, 10>}, {pipeline_mode = #tpu.pipeline_mode<synchronous>, transform_indices = @transform_2, window_bounds = array<i64: 3, 91, 8>}, {pipeline_mode = #tpu.pipeline_mode<synchronous>, transform_indices = @transform_3, window_bounds = array<i64: 2, 3, 14, 8>}]} {
    %cst = arith.constant 1.000000e+00 : f32
    %0 = vector.broadcast %cst : f32 to vector<96x1xf32>
    %c0 = arith.constant 0 : index
    %c0_0 = arith.constant 0 : index
    %1 = vector.load %arg1[%c0, %c0_0] : memref<96x10xf32, #tpu.memory_space<vmem>>, vector<96x10xf32>
    %2 = tpu.concatenate %1, %0 in 1 : vector<96x10xf32>, vector<96x1xf32> -> vector<96x11xf32>
    %c0_1 = arith.constant 0 : index
    %c0_2 = arith.constant 0 : index
    %3 = vector.load %arg2[%c0_1, %c0_2] : memref<11x10xf32, #tpu.memory_space<vmem>>, vector<11x10xf32>
    %cst_3 = arith.constant dense<0.000000e+00> : vector<96x10xf32>
    %4 = tpu.matmul %2, %3, %cst_3 {dimension_numbers = #tpu.dot_dimension_numbers<[1], [0], [0], [1], [0, 0, 1, 1], [], []>} : vector<96x11xf32>, vector<11x10xf32>, vector<96x10xf32> -> vector<96x10xf32>
    %5 = vector.extract_strided_slice %4 {offsets = [1, 0], sizes = [95, 10], strides = [1, 1]} : vector<96x10xf32> to vector<95x10xf32>
    %6 = vector.extract_strided_slice %4 {offsets = [0, 0], sizes = [1, 10], strides = [1, 1]} : vector<96x10xf32> to vector<1x10xf32>
    %7 = tpu.concatenate %5, %6 in 0 : vector<95x10xf32>, vector<1x10xf32> -> vector<96x10xf32>
    %8 = vector.extract_strided_slice %4 {offsets = [2, 0], sizes = [94, 10], strides = [1, 1]} : vector<96x10xf32> to vector<94x10xf32>
    %9 = vector.extract_strided_slice %4 {offsets = [0, 0], sizes = [2, 10], strides = [1, 1]} : vector<96x10xf32> to vector<2x10xf32>
    %10 = tpu.concatenate %8, %9 in 0 : vector<94x10xf32>, vector<2x10xf32> -> vector<96x10xf32>
    %11 = vector.extract_strided_slice %4 {offsets = [16, 0], sizes = [80, 10], strides = [1, 1]} : vector<96x10xf32> to vector<80x10xf32>
    %12 = vector.extract_strided_slice %4 {offsets = [0, 0], sizes = [16, 10], strides = [1, 1]} : vector<96x10xf32> to vector<16x10xf32>
    %13 = tpu.concatenate %11, %12 in 0 : vector<80x10xf32>, vector<16x10xf32> -> vector<96x10xf32>
    %14 = vector.extract_strided_slice %7 {offsets = [16, 0], sizes = [80, 10], strides = [1, 1]} : vector<96x10xf32> to vector<80x10xf32>
    %15 = vector.extract_strided_slice %7 {offsets = [0, 0], sizes = [16, 10], strides = [1, 1]} : vector<96x10xf32> to vector<16x10xf32>
    %16 = tpu.concatenate %14, %15 in 0 : vector<80x10xf32>, vector<16x10xf32> -> vector<96x10xf32>
    %17 = vector.extract_strided_slice %10 {offsets = [16, 0], sizes = [80, 10], strides = [1, 1]} : vector<96x10xf32> to vector<80x10xf32>
    %18 = vector.extract_strided_slice %10 {offsets = [0, 0], sizes = [16, 10], strides = [1, 1]} : vector<96x10xf32> to vector<16x10xf32>
    %19 = tpu.concatenate %17, %18 in 0 : vector<80x10xf32>, vector<16x10xf32> -> vector<96x10xf32>
    %20 = vector.extract_strided_slice %4 {offsets = [32, 0], sizes = [64, 10], strides = [1, 1]} : vector<96x10xf32> to vector<64x10xf32>
    %21 = vector.extract_strided_slice %4 {offsets = [0, 0], sizes = [32, 10], strides = [1, 1]} : vector<96x10xf32> to vector<32x10xf32>
    %22 = tpu.concatenate %20, %21 in 0 : vector<64x10xf32>, vector<32x10xf32> -> vector<96x10xf32>
    %23 = vector.extract_strided_slice %7 {offsets = [32, 0], sizes = [64, 10], strides = [1, 1]} : vector<96x10xf32> to vector<64x10xf32>
    %24 = vector.extract_strided_slice %7 {offsets = [0, 0], sizes = [32, 10], strides = [1, 1]} : vector<96x10xf32> to vector<32x10xf32>
    %25 = tpu.concatenate %23, %24 in 0 : vector<64x10xf32>, vector<32x10xf32> -> vector<96x10xf32>
    %26 = vector.extract_strided_slice %10 {offsets = [32, 0], sizes = [64, 10], strides = [1, 1]} : vector<96x10xf32> to vector<64x10xf32>
    %27 = vector.extract_strided_slice %10 {offsets = [0, 0], sizes = [32, 10], strides = [1, 1]} : vector<96x10xf32> to vector<32x10xf32>
    %28 = tpu.concatenate %26, %27 in 0 : vector<64x10xf32>, vector<32x10xf32> -> vector<96x10xf32>
    %29 = tpu.concatenate %4, %7, %10, %13, %16, %19, %22, %25, %28, %0 in 1 : vector<96x10xf32>, vector<96x10xf32>, vector<96x10xf32>, vector<96x10xf32>, vector<96x10xf32>, vector<96x10xf32>, vector<96x10xf32>, vector<96x10xf32>, vector<96x10xf32>, vector<96x1xf32> -> vector<96x91xf32>
    %c0_4 = arith.constant 0 : index
    %c0_5 = arith.constant 0 : index
    %c0_6 = arith.constant 0 : index
    %30 = vector.load %arg3[%c0_4, %c0_5, %c0_6] : memref<3x91x8xf32, #tpu.memory_space<vmem>>, vector<1x91x8xf32>
    %31 = vector.shape_cast %30 : vector<1x91x8xf32> to vector<91x8xf32>
    %cst_7 = arith.constant dense<0.000000e+00> : vector<96x8xf32>
    %32 = tpu.matmul %29, %31, %cst_7 {dimension_numbers = #tpu.dot_dimension_numbers<[1], [0], [0], [1], [0, 0, 1, 1], [], []>} : vector<96x91xf32>, vector<91x8xf32>, vector<96x8xf32> -> vector<96x8xf32>
    %33 = vector.extract_strided_slice %32 {offsets = [0, 0], sizes = [14, 8], strides = [1, 1]} : vector<96x8xf32> to vector<14x8xf32>
    %c0_8 = arith.constant 0 : index
    %c0_9 = arith.constant 0 : index
    %c0_10 = arith.constant 0 : index
    %c0_11 = arith.constant 0 : index
    %34 = vector.load %arg4[%c0_8, %c0_9, %c0_10, %c0_11] : memref<2x3x14x8xf32, #tpu.memory_space<vmem>>, vector<1x1x14x8xf32>
    %35 = vector.shape_cast %34 : vector<1x1x14x8xf32> to vector<14x8xf32>
    %36 = vector.shape_cast %33 : vector<14x8xf32> to vector<1x1x14x8xf32>
    tpu.vector_store %arg4[%c0_8, %c0_9, %c0_10, %c0_11], %36 {strides = array<i32>} : memref<2x3x14x8xf32, #tpu.memory_space<vmem>>, vector<1x1x14x8xf32>,
    %37 = vector.extract_strided_slice %32 {offsets = [48, 0], sizes = [14, 8], strides = [1, 1]} : vector<96x8xf32> to vector<14x8xf32>
    %c1 = arith.constant 1 : index
    %c0_12 = arith.constant 0 : index
    %c0_13 = arith.constant 0 : index
    %c0_14 = arith.constant 0 : index
    %38 = vector.load %arg4[%c1, %c0_12, %c0_13, %c0_14] : memref<2x3x14x8xf32, #tpu.memory_space<vmem>>, vector<1x1x14x8xf32>
    %39 = vector.shape_cast %38 : vector<1x1x14x8xf32> to vector<14x8xf32>
    %40 = vector.shape_cast %37 : vector<14x8xf32> to vector<1x1x14x8xf32>
    tpu.vector_store %arg4[%c1, %c0_12, %c0_13, %c0_14], %40 {strides = array<i32>} : memref<2x3x14x8xf32, #tpu.memory_space<vmem>>, vector<1x1x14x8xf32>,
    %c1_15 = arith.constant 1 : index
    %c0_16 = arith.constant 0 : index
    %c0_17 = arith.constant 0 : index
    %41 = vector.load %arg3[%c1_15, %c0_16, %c0_17] : memref<3x91x8xf32, #tpu.memory_space<vmem>>, vector<1x91x8xf32>
    %42 = vector.shape_cast %41 : vector<1x91x8xf32> to vector<91x8xf32>
    %cst_18 = arith.constant dense<0.000000e+00> : vector<96x8xf32>
    %43 = tpu.matmul %29, %42, %cst_18 {dimension_numbers = #tpu.dot_dimension_numbers<[1], [0], [0], [1], [0, 0, 1, 1], [], []>} : vector<96x91xf32>, vector<91x8xf32>, vector<96x8xf32> -> vector<96x8xf32>
    %44 = vector.extract_strided_slice %43 {offsets = [0, 0], sizes = [14, 8], strides = [1, 1]} : vector<96x8xf32> to vector<14x8xf32>
    %c0_19 = arith.constant 0 : index
    %c1_20 = arith.constant 1 : index
    %c0_21 = arith.constant 0 : index
    %c0_22 = arith.constant 0 : index
    %45 = vector.load %arg4[%c0_19, %c1_20, %c0_21, %c0_22] : memref<2x3x14x8xf32, #tpu.memory_space<vmem>>, vector<1x1x14x8xf32>
    %46 = vector.shape_cast %45 : vector<1x1x14x8xf32> to vector<14x8xf32>
    %47 = vector.shape_cast %44 : vector<14x8xf32> to vector<1x1x14x8xf32>
    tpu.vector_store %arg4[%c0_19, %c1_20, %c0_21, %c0_22], %47 {strides = array<i32>} : memref<2x3x14x8xf32, #tpu.memory_space<vmem>>, vector<1x1x14x8xf32>,
    %48 = vector.extract_strided_slice %43 {offsets = [48, 0], sizes = [14, 8], strides = [1, 1]} : vector<96x8xf32> to vector<14x8xf32>
    %c1_23 = arith.constant 1 : index
    %c1_24 = arith.constant 1 : index
    %c0_25 = arith.constant 0 : index
    %c0_26 = arith.constant 0 : index
    %49 = vector.load %arg4[%c1_23, %c1_24, %c0_25, %c0_26] : memref<2x3x14x8xf32, #tpu.memory_space<vmem>>, vector<1x1x14x8xf32>
    %50 = vector.shape_cast %49 : vector<1x1x14x8xf32> to vector<14x8xf32>
    %51 = vector.shape_cast %48 : vector<14x8xf32> to vector<1x1x14x8xf32>
    tpu.vector_store %arg4[%c1_23, %c1_24, %c0_25, %c0_26], %51 {strides = array<i32>} : memref<2x3x14x8xf32, #tpu.memory_space<vmem>>, vector<1x1x14x8xf32>,
    %c2 = arith.constant 2 : index
    %c0_27 = arith.constant 0 : index
    %c0_28 = arith.constant 0 : index
    %52 = vector.load %arg3[%c2, %c0_27, %c0_28] : memref<3x91x8xf32, #tpu.memory_space<vmem>>, vector<1x91x8xf32>
    %53 = vector.shape_cast %52 : vector<1x91x8xf32> to vector<91x8xf32>
    %cst_29 = arith.constant dense<0.000000e+00> : vector<96x8xf32>
    %54 = tpu.matmul %29, %53, %cst_29 {dimension_numbers = #tpu.dot_dimension_numbers<[1], [0], [0], [1], [0, 0, 1, 1], [], []>} : vector<96x91xf32>, vector<91x8xf32>, vector<96x8xf32> -> vector<96x8xf32>
    %55 = vector.extract_strided_slice %54 {offsets = [0, 0], sizes = [14, 8], strides = [1, 1]} : vector<96x8xf32> to vector<14x8xf32>
    %c0_30 = arith.constant 0 : index
    %c2_31 = arith.constant 2 : index
    %c0_32 = arith.constant 0 : index
    %c0_33 = arith.constant 0 : index
    %56 = vector.load %arg4[%c0_30, %c2_31, %c0_32, %c0_33] : memref<2x3x14x8xf32, #tpu.memory_space<vmem>>, vector<1x1x14x8xf32>
    %57 = vector.shape_cast %56 : vector<1x1x14x8xf32> to vector<14x8xf32>
    %58 = vector.shape_cast %55 : vector<14x8xf32> to vector<1x1x14x8xf32>
    tpu.vector_store %arg4[%c0_30, %c2_31, %c0_32, %c0_33], %58 {strides = array<i32>} : memref<2x3x14x8xf32, #tpu.memory_space<vmem>>, vector<1x1x14x8xf32>,
    %59 = vector.extract_strided_slice %54 {offsets = [48, 0], sizes = [14, 8], strides = [1, 1]} : vector<96x8xf32> to vector<14x8xf32>
    %c1_34 = arith.constant 1 : index
    %c2_35 = arith.constant 2 : index
    %c0_36 = arith.constant 0 : index
    %c0_37 = arith.constant 0 : index
    %60 = vector.load %arg4[%c1_34, %c2_35, %c0_36, %c0_37] : memref<2x3x14x8xf32, #tpu.memory_space<vmem>>, vector<1x1x14x8xf32>
    %61 = vector.shape_cast %60 : vector<1x1x14x8xf32> to vector<14x8xf32>
    %62 = vector.shape_cast %59 : vector<14x8xf32> to vector<1x1x14x8xf32>
    tpu.vector_store %arg4[%c1_34, %c2_35, %c0_36, %c0_37], %62 {strides = array<i32>} : memref<2x3x14x8xf32, #tpu.memory_space<vmem>>, vector<1x1x14x8xf32>,
    return
  }
  func.func @transform_0(%arg0: i32) -> (i32, i32) {
    %c0_i32 = arith.constant 0 : i32
    %c0_i32_0 = arith.constant 0 : i32
    %c0_i32_1 = arith.constant 0 : i32
    return %c0_i32, %c0_i32_0 : i32, i32
  }
  func.func @transform_1(%arg0: i32) -> (i32, i32) {
    %c0_i32 = arith.constant 0 : i32
    %c0_i32_0 = arith.constant 0 : i32
    %c0_i32_1 = arith.constant 0 : i32
    return %c0_i32, %c0_i32_0 : i32, i32
  }
  func.func @transform_2(%arg0: i32) -> (i32, i32, i32) {
    %c0_i32 = arith.constant 0 : i32
    %c0_i32_0 = arith.constant 0 : i32
    %c0_i32_1 = arith.constant 0 : i32
    %c0_i32_2 = arith.constant 0 : i32
    return %c0_i32, %c0_i32_0, %c0_i32_1 : i32, i32, i32
  }
  func.func @transform_3(%arg0: i32) -> (i32, i32, i32, i32) {
    %c0_i32 = arith.constant 0 : i32
    %c0_i32_0 = arith.constant 0 : i32
    %c0_i32_1 = arith.constant 0 : i32
    %c0_i32_2 = arith.constant 0 : i32
    %c0_i32_3 = arith.constant 0 : i32
    return %c0_i32, %c0_i32_0, %c0_i32_1, %c0_i32_2 : i32, i32, i32, i32
  }
}

</mosaic_0001>

<llo_original>
// kernel: tpu_custom_call.1
$region0: #{tpu_custom_call.1}
  #allocation0 [shape = 'u32[]', space=smem, size = 0x4, offset = 0x4, fixed_abs, tag = 'smem constant byte address 0x4 - core index']
  #allocation1 [shape = 'u32[144,128]{1,0:T(1,128)}', space=vmem, size = 0x12000, scoped, tag = 'internal scratch']
  %s0 = inlined_call_operand.vmem [shape: f32[96,10], index: 0, kind: input, shape index: {}]
  %s1 = inlined_call_operand.vmem [shape: f32[11,10], index: 1, kind: input, shape index: {}]
  %s2 = inlined_call_operand.vmem [shape: f32[3,91,8], index: 2, kind: input, shape index: {}]
  %s3 = inlined_call_operand.vmem [shape: f32[2,3,14,8], index: 3, kind: output, shape index: {}]
  %s4 = sld [smem:[#allocation0]]
  $region22: #{tpu_custom_call.1} parent=0
    _
  %s6 = ssub.s32 1, %s4
  %s7 = scalar_select 0, %s6, %s4
  // Predicated region
  $region2: #{tpu_custom_call.1} parent=0 // pred_check
    _
  $region3: #{tpu_custom_call.1} parent=0 // pred_check_branch
    %9 = sbr.rel (0) target = $region5
  $region4: #{tpu_custom_call.1} parent=0 // pred_region
    _
  $region5: #{tpu_custom_call.1} parent=0 // pred_fallthru
    _
  // Predicated region
  $region6: #{tpu_custom_call.1} parent=0 // pred_check
    _
  $region7: #{tpu_custom_call.1} parent=0 // pred_check_branch
    %11 = sbr.rel (0) target = $region9
  $region8: #{tpu_custom_call.1} parent=0 // pred_region
    _
  $region9: #{tpu_custom_call.1} parent=0 // pred_fallthru
    _
  // Predicated region
  $region10: #{tpu_custom_call.1} parent=0 // pred_check
    _
  $region11: #{tpu_custom_call.1} parent=0 // pred_check_branch
    %13 = sbr.rel (0) target = $region13
  $region12: #{tpu_custom_call.1} parent=0 // pred_region
    _
  $region13: #{tpu_custom_call.1} parent=0 // pred_fallthru
    _
  %v14 = vld [vmem:[%s0] sm:$0xff]
  %v15 = vld [vmem:[%s0 + $0x8] sm:$0xff]
  %v16 = vld [vmem:[%s0 + $0x10] sm:$0xff]
  %v17 = vld [vmem:[%s0 + $0x18] sm:$0xff]
  %v18 = vld [vmem:[%s0 + $0x20] sm:$0xff]
  %v19 = vld [vmem:[%s0 + $0x28] sm:$0xff]
  %v20 = vld [vmem:[%s0 + $0x30] sm:$0xff]
  %v21 = vld [vmem:[%s0 + $0x38] sm:$0xff]
  %v22 = vld [vmem:[%s0 + $0x40] sm:$0xff]
  %v23 = vld [vmem:[%s0 + $0x48] sm:$0xff]
  %v24 = vld [vmem:[%s0 + $0x50] sm:$0xff]
  %v25 = vld [vmem:[%s0 + $0x58] sm:$0xff]
  %vm26 = vcmask 80896
  %v27 = vsel %vm26, %v14, 1.0
  %v28 = vsel %vm26, %v15, 1.0
  %v29 = vsel %vm26, %v16, 1.0
  %v30 = vsel %vm26, %v17, 1.0
  %v31 = vsel %vm26, %v18, 1.0
  %v32 = vsel %vm26, %v19, 1.0
  %v33 = vsel %vm26, %v20, 1.0
  %v34 = vsel %vm26, %v21, 1.0
  %v35 = vsel %vm26, %v22, 1.0
  %v36 = vsel %vm26, %v23, 1.0
  %v37 = vsel %vm26, %v24, 1.0
  %v38 = vsel %vm26, %v25, 1.0
  %v39 = vld [vmem:[%s1] sm:$0xff]
  %v40 = vld [vmem:[%s1 + $0x8] sm:$0x7]
  %vm41 = vcmask 89088
  %v43 = vsel %vm41, %v27, 0
  %v46 = vsel %vm41, %v28, 0
  %v49 = vsel %vm41, %v29, 0
  %v52 = vsel %vm41, %v30, 0
  %v55 = vsel %vm41, %v31, 0
  %v58 = vsel %vm41, %v32, 0
  %v61 = vsel %vm41, %v33, 0
  %v64 = vsel %vm41, %v34, 0
  %v67 = vsel %vm41, %v35, 0
  %v70 = vsel %vm41, %v36, 0
  %v73 = vsel %vm41, %v37, 0
  %v76 = vsel %vm41, %v38, 0
  %vm78 = vcmask 1042432
  %v80 = vsel %vm78, %v40, 0
  %82 = vmatprep.subr.mxu0 0.0
  %83 = vmatpush1.msra.mxu0 %v39
  %84 = vmatprep.subr.mxu0 0.0
  %85 = vmatpush1.msra.mxu0 %v80
  %86 = vmatprep.subr.mxu0 0.0
  %87 = vmatpush1.msra.mxu0 0.0
  %88 = vmatprep.subr.mxu0 0.0
  %89 = vmatpush1.msra.mxu0 0.0
  %90 = vmatprep.subr.mxu0 0.0
  %91 = vmatpush1.msra.mxu0 0.0
  %92 = vmatprep.subr.mxu0 0.0
  %93 = vmatpush1.msra.mxu0 0.0
  %94 = vmatprep.subr.mxu0 0.0
  %95 = vmatpush1.msra.mxu0 0.0
  %96 = vmatprep.subr.mxu0 0.0
  %97 = vmatpush1.msra.mxu0 0.0
  %98 = vmatprep.subr.mxu0 0.0
  %99 = vmatpush1.msra.mxu0 0.0
  %100 = vmatprep.subr.mxu0 0.0
  %101 = vmatpush1.msra.mxu0 0.0
  %102 = vmatprep.subr.mxu0 0.0
  %103 = vmatpush1.msra.mxu0 0.0
  %104 = vmatprep.subr.mxu0 0.0
  %105 = vmatpush1.msra.mxu0 0.0
  %106 = vmatprep.subr.mxu0 0.0
  %107 = vmatpush1.msra.mxu0 0.0
  %108 = vmatprep.subr.mxu0 0.0
  %109 = vmatpush1.msra.mxu0 0.0
  %110 = vmatprep.subr.mxu0 0.0
  %111 = vmatpush1.msra.mxu0 0.0
  %112 = vmatprep.subr.mxu0 0.0
  %113 = vmatpush1.msra.mxu0 0.0
  %114 = vmatprep.subr.mxu0 0.0
  %115 = vmatpush1.msra.mxu0 0.0
  %116 = vmatprep.subr.mxu0 0.0
  %117 = vmatpush1.msra.mxu0 0.0
  %118 = vmatprep.subr.mxu0 0.0
  %119 = vmatpush1.msra.mxu0 0.0
  %120 = vmatprep.subr.mxu0 0.0
  %121 = vmatpush1.msra.mxu0 0.0
  %122 = vmatprep.subr.mxu0 0.0
  %123 = vmatpush1.msra.mxu0 0.0
  %124 = vmatprep.subr.mxu0 0.0
  %125 = vmatpush1.msra.mxu0 0.0
  %126 = vmatprep.subr.mxu0 0.0
  %127 = vmatpush1.msra.mxu0 0.0
  %128 = vmatprep.subr.mxu0 0.0
  %129 = vmatpush1.msra.mxu0 0.0
  %130 = vmatprep.subr.mxu0 0.0
  %131 = vmatpush1.msra.mxu0 0.0
  %132 = vmatprep.subr.mxu0 0.0
  %133 = vmatpush1.msra.mxu0 0.0
  %134 = vmatprep.subr.mxu0 0.0
  %135 = vmatpush1.msra.mxu0 0.0
  %136 = vmatprep.subr.mxu0 0.0
  %137 = vmatpush1.msra.mxu0 0.0
  %138 = vmatprep.subr.mxu0 0.0
  %139 = vmatpush1.msra.mxu0 0.0
  %140 = vmatprep.subr.mxu0 0.0
  %141 = vmatpush1.msra.mxu0 0.0
  %142 = vmatprep.subr.mxu0 0.0
  %143 = vmatpush1.msra.mxu0 0.0
  %144 = vmatprep.subr.mxu0 0.0
  %145 = vmatpush1.msra.mxu0 0.0
  %146 = vmatprep.mubr.f32.mxu0 0.0
  %147 = vmatmul.mubr.f32.gmra.mrb[0].mxu0 %v43
  %v148 = vpop.f32.mrb[0].mxu0
  %v149 = vadd.f32 0.0, %v148
  %v150 = vpop.f32.mrb[0].mxu0
  %151 = vmatprep.mubr.f32.mxu0 0.0
  %152 = vmatmul.mubr.f32.gmra.mrb[0].mxu0 %v46
  %v153 = vpop.f32.mrb[0].mxu0
  %v154 = vadd.f32 0.0, %v153
  %v155 = vpop.f32.mrb[0].mxu0
  %156 = vmatprep.mubr.f32.mxu0 0.0
  %157 = vmatmul.mubr.f32.gmra.mrb[0].mxu0 %v49
  %v158 = vpop.f32.mrb[0].mxu0
  %v159 = vadd.f32 0.0, %v158
  %v160 = vpop.f32.mrb[0].mxu0
  %161 = vmatprep.mubr.f32.mxu0 0.0
  %162 = vmatmul.mubr.f32.gmra.mrb[0].mxu0 %v52
  %v163 = vpop.f32.mrb[0].mxu0
  %v164 = vadd.f32 0.0, %v163
  %v165 = vpop.f32.mrb[0].mxu0
  %166 = vmatprep.mubr.f32.mxu0 0.0
  %167 = vmatmul.mubr.f32.gmra.mrb[0].mxu0 %v55
  %v168 = vpop.f32.mrb[0].mxu0
  %v169 = vadd.f32 0.0, %v168
  %v170 = vpop.f32.mrb[0].mxu0
  %171 = vmatprep.mubr.f32.mxu0 0.0
  %172 = vmatmul.mubr.f32.gmra.mrb[0].mxu0 %v58
  %v173 = vpop.f32.mrb[0].mxu0
  %v174 = vadd.f32 0.0, %v173
  %v175 = vpop.f32.mrb[0].mxu0
  %176 = vmatprep.mubr.f32.mxu0 0.0
  %177 = vmatmul.mubr.f32.gmra.mrb[0].mxu0 %v61
  %v178 = vpop.f32.mrb[0].mxu0
  %v179 = vadd.f32 0.0, %v178
  %v180 = vpop.f32.mrb[0].mxu0
  %181 = vmatprep.mubr.f32.mxu0 0.0
  %182 = vmatmul.mubr.f32.gmra.mrb[0].mxu0 %v64
  %v183 = vpop.f32.mrb[0].mxu0
  %v184 = vadd.f32 0.0, %v183
  %v185 = vpop.f32.mrb[0].mxu0
  %186 = vmatprep.mubr.f32.mxu0 0.0
  %187 = vmatmul.mubr.f32.gmra.mrb[0].mxu0 %v67
  %v188 = vpop.f32.mrb[0].mxu0
  %v189 = vadd.f32 0.0, %v188
  %v190 = vpop.f32.mrb[0].mxu0
  %191 = vmatprep.mubr.f32.mxu0 0.0
  %192 = vmatmul.mubr.f32.gmra.mrb[0].mxu0 %v70
  %v193 = vpop.f32.mrb[0].mxu0
  %v194 = vadd.f32 0.0, %v193
  %v195 = vpop.f32.mrb[0].mxu0
  %196 = vmatprep.mubr.f32.mxu0 0.0
  %197 = vmatmul.mubr.f32.gmra.mrb[0].mxu0 %v73
  %v198 = vpop.f32.mrb[0].mxu0
  %v199 = vadd.f32 0.0, %v198
  %v200 = vpop.f32.mrb[0].mxu0
  %201 = vmatprep.mubr.f32.mxu0 0.0
  %202 = vmatmul.mubr.f32.gmra.mrb[0].mxu0 %v76
  %v203 = vpop.f32.mrb[0].mxu0
  %v204 = vadd.f32 0.0, %v203
  %v205 = vpop.f32.mrb[0].mxu0
  %206 = vdwg.mxu0
  %vm219 = vcmask 1046528
  %v220 = vrot.slane %v149, 1
  %v221 = vrot.slane %v154, 1
  %v222 = vsel %vm219, %v220, %v221
  %v223 = vrot.slane %v159, 1
  %v224 = vsel %vm219, %v221, %v223
  %v225 = vrot.slane %v164, 1
  %v226 = vsel %vm219, %v223, %v225
  %v227 = vrot.slane %v169, 1
  %v228 = vsel %vm219, %v225, %v227
  %v229 = vrot.slane %v174, 1
  %v230 = vsel %vm219, %v227, %v229
  %v231 = vrot.slane %v179, 1
  %v232 = vsel %vm219, %v229, %v231
  %v233 = vrot.slane %v184, 1
  %v234 = vsel %vm219, %v231, %v233
  %v235 = vrot.slane %v189, 1
  %v236 = vsel %vm219, %v233, %v235
  %v237 = vrot.slane %v194, 1
  %v238 = vsel %vm219, %v235, %v237
  %v239 = vrot.slane %v199, 1
  %v240 = vsel %vm219, %v237, %v239
  %v241 = vrot.slane %v204, 1
  %v242 = vsel %vm219, %v239, %v241
  %v245 = vsel %vm219, %v241, %v220
  %vm246 = vcmask 1045504
  %v247 = vrot.slane %v149, 2
  %v248 = vrot.slane %v154, 2
  %v249 = vsel %vm246, %v247, %v248
  %v250 = vrot.slane %v159, 2
  %v251 = vsel %vm246, %v248, %v250
  %v252 = vrot.slane %v164, 2
  %v253 = vsel %vm246, %v250, %v252
  %v254 = vrot.slane %v169, 2
  %v255 = vsel %vm246, %v252, %v254
  %v256 = vrot.slane %v174, 2
  %v257 = vsel %vm246, %v254, %v256
  %v258 = vrot.slane %v179, 2
  %v259 = vsel %vm246, %v256, %v258
  %v260 = vrot.slane %v184, 2
  %v261 = vsel %vm246, %v258, %v260
  %v262 = vrot.slane %v189, 2
  %v263 = vsel %vm246, %v260, %v262
  %v264 = vrot.slane %v194, 2
  %v265 = vsel %vm246, %v262, %v264
  %v266 = vrot.slane %v199, 2
  %v267 = vsel %vm246, %v264, %v266
  %v268 = vrot.slane %v204, 2
  %v269 = vsel %vm246, %v266, %v268
  %v272 = vsel %vm246, %v268, %v247
  %274 = vrot.lane.b32.xlu0 %v222, 10
  %v275 = vpop.permute.xlu0 %274
  %276 = vrot.lane.b32.xlu0 %v224, 10
  %v277 = vpop.permute.xlu0 %276
  %278 = vrot.lane.b32.xlu0 %v226, 10
  %v279 = vpop.permute.xlu0 %278
  %280 = vrot.lane.b32.xlu0 %v228, 10
  %v281 = vpop.permute.xlu0 %280
  %282 = vrot.lane.b32.xlu0 %v230, 10
  %v283 = vpop.permute.xlu0 %282
  %284 = vrot.lane.b32.xlu0 %v232, 10
  %v285 = vpop.permute.xlu0 %284
  %286 = vrot.lane.b32.xlu0 %v234, 10
  %v287 = vpop.permute.xlu0 %286
  %288 = vrot.lane.b32.xlu0 %v236, 10
  %v289 = vpop.permute.xlu0 %288
  %290 = vrot.lane.b32.xlu0 %v238, 10
  %v291 = vpop.permute.xlu0 %290
  %292 = vrot.lane.b32.xlu0 %v240, 10
  %v293 = vpop.permute.xlu0 %292
  %294 = vrot.lane.b32.xlu0 %v242, 10
  %v295 = vpop.permute.xlu0 %294
  %296 = vrot.lane.b32.xlu0 %v245, 10
  %v297 = vpop.permute.xlu0 %296
  %311 = vrot.lane.b32.xlu0 %v249, 20
  %v312 = vpop.permute.xlu0 %311
  %313 = vrot.lane.b32.xlu0 %v251, 20
  %v314 = vpop.permute.xlu0 %313
  %315 = vrot.lane.b32.xlu0 %v253, 20
  %v316 = vpop.permute.xlu0 %315
  %317 = vrot.lane.b32.xlu0 %v255, 20
  %v318 = vpop.permute.xlu0 %317
  %319 = vrot.lane.b32.xlu0 %v257, 20
  %v320 = vpop.permute.xlu0 %319
  %321 = vrot.lane.b32.xlu0 %v259, 20
  %v322 = vpop.permute.xlu0 %321
  %323 = vrot.lane.b32.xlu0 %v261, 20
  %v324 = vpop.permute.xlu0 %323
  %325 = vrot.lane.b32.xlu0 %v263, 20
  %v326 = vpop.permute.xlu0 %325
  %327 = vrot.lane.b32.xlu0 %v265, 20
  %v328 = vpop.permute.xlu0 %327
  %329 = vrot.lane.b32.xlu0 %v267, 20
  %v330 = vpop.permute.xlu0 %329
  %331 = vrot.lane.b32.xlu0 %v269, 20
  %v332 = vpop.permute.xlu0 %331
  %333 = vrot.lane.b32.xlu0 %v272, 20
  %v334 = vpop.permute.xlu0 %333
  %347 = vrot.lane.b32.xlu0 %v159, 30
  %v348 = vpop.permute.xlu0 %347
  %349 = vrot.lane.b32.xlu0 %v164, 30
  %v350 = vpop.permute.xlu0 %349
  %351 = vrot.lane.b32.xlu0 %v169, 30
  %v352 = vpop.permute.xlu0 %351
  %353 = vrot.lane.b32.xlu0 %v174, 30
  %v354 = vpop.permute.xlu0 %353
  %355 = vrot.lane.b32.xlu0 %v179, 30
  %v356 = vpop.permute.xlu0 %355
  %357 = vrot.lane.b32.xlu0 %v184, 30
  %v358 = vpop.permute.xlu0 %357
  %359 = vrot.lane.b32.xlu0 %v189, 30
  %v360 = vpop.permute.xlu0 %359
  %361 = vrot.lane.b32.xlu0 %v194, 30
  %v362 = vpop.permute.xlu0 %361
  %363 = vrot.lane.b32.xlu0 %v199, 30
  %v364 = vpop.permute.xlu0 %363
  %365 = vrot.lane.b32.xlu0 %v204, 30
  %v366 = vpop.permute.xlu0 %365
  %367 = vrot.lane.b32.xlu0 %v149, 30
  %v368 = vpop.permute.xlu0 %367
  %369 = vrot.lane.b32.xlu0 %v154, 30
  %v370 = vpop.permute.xlu0 %369
  %383 = vrot.lane.b32.xlu0 %v226, 40
  %v384 = vpop.permute.xlu0 %383
  %385 = vrot.lane.b32.xlu0 %v228, 40
  %v386 = vpop.permute.xlu0 %385
  %387 = vrot.lane.b32.xlu0 %v230, 40
  %v388 = vpop.permute.xlu0 %387
  %389 = vrot.lane.b32.xlu0 %v232, 40
  %v390 = vpop.permute.xlu0 %389
  %391 = vrot.lane.b32.xlu0 %v234, 40
  %v392 = vpop.permute.xlu0 %391
  %393 = vrot.lane.b32.xlu0 %v236, 40
  %v394 = vpop.permute.xlu0 %393
  %395 = vrot.lane.b32.xlu0 %v238, 40
  %v396 = vpop.permute.xlu0 %395
  %397 = vrot.lane.b32.xlu0 %v240, 40
  %v398 = vpop.permute.xlu0 %397
  %399 = vrot.lane.b32.xlu0 %v242, 40
  %v400 = vpop.permute.xlu0 %399
  %401 = vrot.lane.b32.xlu0 %v245, 40
  %v402 = vpop.permute.xlu0 %401
  %403 = vrot.lane.b32.xlu0 %v222, 40
  %v404 = vpop.permute.xlu0 %403
  %405 = vrot.lane.b32.xlu0 %v224, 40
  %v406 = vpop.permute.xlu0 %405
  %419 = vrot.lane.b32.xlu0 %v253, 50
  %v420 = vpop.permute.xlu0 %419
  %421 = vrot.lane.b32.xlu0 %v255, 50
  %v422 = vpop.permute.xlu0 %421
  %423 = vrot.lane.b32.xlu0 %v257, 50
  %v424 = vpop.permute.xlu0 %423
  %425 = vrot.lane.b32.xlu0 %v259, 50
  %v426 = vpop.permute.xlu0 %425
  %427 = vrot.lane.b32.xlu0 %v261, 50
  %v428 = vpop.permute.xlu0 %427
  %429 = vrot.lane.b32.xlu0 %v263, 50
  %v430 = vpop.permute.xlu0 %429
  %431 = vrot.lane.b32.xlu0 %v265, 50
  %v432 = vpop.permute.xlu0 %431
  %433 = vrot.lane.b32.xlu0 %v267, 50
  %v434 = vpop.permute.xlu0 %433
  %435 = vrot.lane.b32.xlu0 %v269, 50
  %v436 = vpop.permute.xlu0 %435
  %437 = vrot.lane.b32.xlu0 %v272, 50
  %v438 = vpop.permute.xlu0 %437
  %439 = vrot.lane.b32.xlu0 %v249, 50
  %v440 = vpop.permute.xlu0 %439
  %441 = vrot.lane.b32.xlu0 %v251, 50
  %v442 = vpop.permute.xlu0 %441
  %455 = vrot.lane.b32.xlu0 %v169, 60
  %v456 = vpop.permute.xlu0 %455
  %457 = vrot.lane.b32.xlu0 %v174, 60
  %v458 = vpop.permute.xlu0 %457
  %459 = vrot.lane.b32.xlu0 %v179, 60
  %v460 = vpop.permute.xlu0 %459
  %461 = vrot.lane.b32.xlu0 %v184, 60
  %v462 = vpop.permute.xlu0 %461
  %463 = vrot.lane.b32.xlu0 %v189, 60
  %v464 = vpop.permute.xlu0 %463
  %465 = vrot.lane.b32.xlu0 %v194, 60
  %v466 = vpop.permute.xlu0 %465
  %467 = vrot.lane.b32.xlu0 %v199, 60
  %v468 = vpop.permute.xlu0 %467
  %469 = vrot.lane.b32.xlu0 %v204, 60
  %v470 = vpop.permute.xlu0 %469
  %471 = vrot.lane.b32.xlu0 %v149, 60
  %v472 = vpop.permute.xlu0 %471
  %473 = vrot.lane.b32.xlu0 %v154, 60
  %v474 = vpop.permute.xlu0 %473
  %475 = vrot.lane.b32.xlu0 %v159, 60
  %v476 = vpop.permute.xlu0 %475
  %477 = vrot.lane.b32.xlu0 %v164, 60
  %v478 = vpop.permute.xlu0 %477
  %491 = vrot.lane.b32.xlu0 %v230, 70
  %v492 = vpop.permute.xlu0 %491
  %493 = vrot.lane.b32.xlu0 %v232, 70
  %v494 = vpop.permute.xlu0 %493
  %495 = vrot.lane.b32.xlu0 %v234, 70
  %v496 = vpop.permute.xlu0 %495
  %497 = vrot.lane.b32.xlu0 %v236, 70
  %v498 = vpop.permute.xlu0 %497
  %499 = vrot.lane.b32.xlu0 %v238, 70
  %v500 = vpop.permute.xlu0 %499
  %501 = vrot.lane.b32.xlu0 %v240, 70
  %v502 = vpop.permute.xlu0 %501
  %503 = vrot.lane.b32.xlu0 %v242, 70
  %v504 = vpop.permute.xlu0 %503
  %505 = vrot.lane.b32.xlu0 %v245, 70
  %v506 = vpop.permute.xlu0 %505
  %507 = vrot.lane.b32.xlu0 %v222, 70
  %v508 = vpop.permute.xlu0 %507
  %509 = vrot.lane.b32.xlu0 %v224, 70
  %v510 = vpop.permute.xlu0 %509
  %511 = vrot.lane.b32.xlu0 %v226, 70
  %v512 = vpop.permute.xlu0 %511
  %513 = vrot.lane.b32.xlu0 %v228, 70
  %v514 = vpop.permute.xlu0 %513
  %527 = vrot.lane.b32.xlu0 %v257, 80
  %v528 = vpop.permute.xlu0 %527
  %529 = vrot.lane.b32.xlu0 %v259, 80
  %v530 = vpop.permute.xlu0 %529
  %531 = vrot.lane.b32.xlu0 %v261, 80
  %v532 = vpop.permute.xlu0 %531
  %533 = vrot.lane.b32.xlu0 %v263, 80
  %v534 = vpop.permute.xlu0 %533
  %535 = vrot.lane.b32.xlu0 %v265, 80
  %v536 = vpop.permute.xlu0 %535
  %537 = vrot.lane.b32.xlu0 %v267, 80
  %v538 = vpop.permute.xlu0 %537
  %539 = vrot.lane.b32.xlu0 %v269, 80
  %v540 = vpop.permute.xlu0 %539
  %541 = vrot.lane.b32.xlu0 %v272, 80
  %v542 = vpop.permute.xlu0 %541
  %543 = vrot.lane.b32.xlu0 %v249, 80
  %v544 = vpop.permute.xlu0 %543
  %545 = vrot.lane.b32.xlu0 %v251, 80
  %v546 = vpop.permute.xlu0 %545
  %547 = vrot.lane.b32.xlu0 %v253, 80
  %v548 = vpop.permute.xlu0 %547
  %549 = vrot.lane.b32.xlu0 %v255, 80
  %v550 = vpop.permute.xlu0 %549
  %v563 = vsel %vm26, %v149, %v275
  %v564 = vsel %vm26, %v154, %v277
  %v565 = vsel %vm26, %v159, %v279
  %v566 = vsel %vm26, %v164, %v281
  %v567 = vsel %vm26, %v169, %v283
  %v568 = vsel %vm26, %v174, %v285
  %v569 = vsel %vm26, %v179, %v287
  %v570 = vsel %vm26, %v184, %v289
  %v571 = vsel %vm26, %v189, %v291
  %v572 = vsel %vm26, %v194, %v293
  %v573 = vsel %vm26, %v199, %v295
  %v574 = vsel %vm26, %v204, %v297
  %vm575 = vcmask 162816
  %v576 = vsel %vm575, %v563, %v312
  %v577 = vsel %vm575, %v564, %v314
  %v578 = vsel %vm575, %v565, %v316
  %v579 = vsel %vm575, %v566, %v318
  %v580 = vsel %vm575, %v567, %v320
  %v581 = vsel %vm575, %v568, %v322
  %v582 = vsel %vm575, %v569, %v324
  %v583 = vsel %vm575, %v570, %v326
  %v584 = vsel %vm575, %v571, %v328
  %v585 = vsel %vm575, %v572, %v330
  %v586 = vsel %vm575, %v573, %v332
  %v587 = vsel %vm575, %v574, %v334
  %vm588 = vcmask 244736
  %v589 = vsel %vm588, %v576, %v348
  %v590 = vsel %vm588, %v577, %v350
  %v591 = vsel %vm588, %v578, %v352
  %v592 = vsel %vm588, %v579, %v354
  %v593 = vsel %vm588, %v580, %v356
  %v594 = vsel %vm588, %v581, %v358
  %v595 = vsel %vm588, %v582, %v360
  %v596 = vsel %vm588, %v583, %v362
  %v597 = vsel %vm588, %v584, %v364
  %v598 = vsel %vm588, %v585, %v366
  %v599 = vsel %vm588, %v586, %v368
  %v600 = vsel %vm588, %v587, %v370
  %vm601 = vcmask 326656
  %v602 = vsel %vm601, %v589, %v384
  %v603 = vsel %vm601, %v590, %v386
  %v604 = vsel %vm601, %v591, %v388
  %v605 = vsel %vm601, %v592, %v390
  %v606 = vsel %vm601, %v593, %v392
  %v607 = vsel %vm601, %v594, %v394
  %v608 = vsel %vm601, %v595, %v396
  %v609 = vsel %vm601, %v596, %v398
  %v610 = vsel %vm601, %v597, %v400
  %v611 = vsel %vm601, %v598, %v402
  %v612 = vsel %vm601, %v599, %v404
  %v613 = vsel %vm601, %v600, %v406
  %vm614 = vcmask 408576
  %v615 = vsel %vm614, %v602, %v420
  %v616 = vsel %vm614, %v603, %v422
  %v617 = vsel %vm614, %v604, %v424
  %v618 = vsel %vm614, %v605, %v426
  %v619 = vsel %vm614, %v606, %v428
  %v620 = vsel %vm614, %v607, %v430
  %v621 = vsel %vm614, %v608, %v432
  %v622 = vsel %vm614, %v609, %v434
  %v623 = vsel %vm614, %v610, %v436
  %v624 = vsel %vm614, %v611, %v438
  %v625 = vsel %vm614, %v612, %v440
  %v626 = vsel %vm614, %v613, %v442
  %vm627 = vcmask 490496
  %v628 = vsel %vm627, %v615, %v456
  %v629 = vsel %vm627, %v616, %v458
  %v630 = vsel %vm627, %v617, %v460
  %v631 = vsel %vm627, %v618, %v462
  %v632 = vsel %vm627, %v619, %v464
  %v633 = vsel %vm627, %v620, %v466
  %v634 = vsel %vm627, %v621, %v468
  %v635 = vsel %vm627, %v622, %v470
  %v636 = vsel %vm627, %v623, %v472
  %v637 = vsel %vm627, %v624, %v474
  %v638 = vsel %vm627, %v625, %v476
  %v639 = vsel %vm627, %v626, %v478
  %vm640 = vcmask 572416
  %v641 = vsel %vm640, %v628, %v492
  %v642 = vsel %vm640, %v629, %v494
  %v643 = vsel %vm640, %v630, %v496
  %v644 = vsel %vm640, %v631, %v498
  %v645 = vsel %vm640, %v632, %v500
  %v646 = vsel %vm640, %v633, %v502
  %v647 = vsel %vm640, %v634, %v504
  %v648 = vsel %vm640, %v635, %v506
  %v649 = vsel %vm640, %v636, %v508
  %v650 = vsel %vm640, %v637, %v510
  %v651 = vsel %vm640, %v638, %v512
  %v652 = vsel %vm640, %v639, %v514
  %vm653 = vcmask 654336
  %v654 = vsel %vm653, %v641, %v528
  %v655 = vsel %vm653, %v642, %v530
  %v656 = vsel %vm653, %v643, %v532
  %v657 = vsel %vm653, %v644, %v534
  %v658 = vsel %vm653, %v645, %v536
  %v659 = vsel %vm653, %v646, %v538
  %v660 = vsel %vm653, %v647, %v540
  %v661 = vsel %vm653, %v648, %v542
  %v662 = vsel %vm653, %v649, %v544
  %v663 = vsel %vm653, %v650, %v546
  %v664 = vsel %vm653, %v651, %v548
  %v665 = vsel %vm653, %v652, %v550
  %vm666 = vcmask 736256
  %v667 = vsel %vm666, %v654, 1.0
  %v668 = vsel %vm666, %v655, 1.0
  %v669 = vsel %vm666, %v656, 1.0
  %v670 = vsel %vm666, %v657, 1.0
  %v671 = vsel %vm666, %v658, 1.0
  %v672 = vsel %vm666, %v659, 1.0
  %v673 = vsel %vm666, %v660, 1.0
  %v674 = vsel %vm666, %v661, 1.0
  %v675 = vsel %vm666, %v662, 1.0
  %v676 = vsel %vm666, %v663, 1.0
  %v677 = vsel %vm666, %v664, 1.0
  %v678 = vsel %vm666, %v665, 1.0
  %v679 = vld [vmem:[%s2] sm:$0xff]
  %v680 = vld [vmem:[%s2 + $0x8] sm:$0xff]
  %v681 = vld [vmem:[%s2 + $0x10] sm:$0xff]
  %v682 = vld [vmem:[%s2 + $0x18] sm:$0xff]
  %v683 = vld [vmem:[%s2 + $0x20] sm:$0xff]
  %v684 = vld [vmem:[%s2 + $0x28] sm:$0xff]
  %v685 = vld [vmem:[%s2 + $0x30] sm:$0xff]
  %v686 = vld [vmem:[%s2 + $0x38] sm:$0xff]
  %v687 = vld [vmem:[%s2 + $0x40] sm:$0xff]
  %v688 = vld [vmem:[%s2 + $0x48] sm:$0xff]
  %v689 = vld [vmem:[%s2 + $0x50] sm:$0xff]
  %v690 = vld [vmem:[%s2 + $0x58] sm:$0x7]
  %vm691 = vcmask 744448
  %v693 = vsel %vm691, %v667, 0
  %v696 = vsel %vm691, %v668, 0
  %v699 = vsel %vm691, %v669, 0
  %v702 = vsel %vm691, %v670, 0
  %v705 = vsel %vm691, %v671, 0
  %v708 = vsel %vm691, %v672, 0
  %v711 = vsel %vm691, %v673, 0
  %v714 = vsel %vm691, %v674, 0
  %v717 = vsel %vm691, %v675, 0
  %v720 = vsel %vm691, %v676, 0
  %v723 = vsel %vm691, %v677, 0
  %v726 = vsel %vm691, %v678, 0
  %v729 = vsel %vm78, %v690, 0
  %731 = vmatprep.subr.mxu0 0.0
  %732 = vmatpush1.msra.mxu0 %v679
  %733 = vmatprep.subr.mxu0 0.0
  %734 = vmatpush1.msra.mxu0 %v680
  %735 = vmatprep.subr.mxu0 0.0
  %736 = vmatpush1.msra.mxu0 %v681
  %737 = vmatprep.subr.mxu0 0.0
  %738 = vmatpush1.msra.mxu0 %v682
  %739 = vmatprep.subr.mxu0 0.0
  %740 = vmatpush1.msra.mxu0 %v683
  %741 = vmatprep.subr.mxu0 0.0
  %742 = vmatpush1.msra.mxu0 %v684
  %743 = vmatprep.subr.mxu0 0.0
  %744 = vmatpush1.msra.mxu0 %v685
  %745 = vmatprep.subr.mxu0 0.0
  %746 = vmatpush1.msra.mxu0 %v686
  %747 = vmatprep.subr.mxu0 0.0
  %748 = vmatpush1.msra.mxu0 %v687
  %749 = vmatprep.subr.mxu0 0.0
  %750 = vmatpush1.msra.mxu0 %v688
  %751 = vmatprep.subr.mxu0 0.0
  %752 = vmatpush1.msra.mxu0 %v689
  %753 = vmatprep.subr.mxu0 0.0
  %754 = vmatpush1.msra.mxu0 %v729
  %755 = vmatprep.subr.mxu0 0.0
  %756 = vmatpush1.msra.mxu0 0.0
  %757 = vmatprep.subr.mxu0 0.0
  %758 = vmatpush1.msra.mxu0 0.0
  %759 = vmatprep.subr.mxu0 0.0
  %760 = vmatpush1.msra.mxu0 0.0
  %761 = vmatprep.subr.mxu0 0.0
  %762 = vmatpush1.msra.mxu0 0.0
  %763 = vmatprep.subr.mxu0 0.0
  %764 = vmatpush1.msra.mxu0 0.0
  %765 = vmatprep.subr.mxu0 0.0
  %766 = vmatpush1.msra.mxu0 0.0
  %767 = vmatprep.subr.mxu0 0.0
  %768 = vmatpush1.msra.mxu0 0.0
  %769 = vmatprep.subr.mxu0 0.0
  %770 = vmatpush1.msra.mxu0 0.0
  %771 = vmatprep.subr.mxu0 0.0
  %772 = vmatpush1.msra.mxu0 0.0
  %773 = vmatprep.subr.mxu0 0.0
  %774 = vmatpush1.msra.mxu0 0.0
  %775 = vmatprep.subr.mxu0 0.0
  %776 = vmatpush1.msra.mxu0 0.0
  %777 = vmatprep.subr.mxu0 0.0
  %778 = vmatpush1.msra.mxu0 0.0
  %779 = vmatprep.subr.mxu0 0.0
  %780 = vmatpush1.msra.mxu0 0.0
  %781 = vmatprep.subr.mxu0 0.0
  %782 = vmatpush1.msra.mxu0 0.0
  %783 = vmatprep.subr.mxu0 0.0
  %784 = vmatpush1.msra.mxu0 0.0
  %785 = vmatprep.subr.mxu0 0.0
  %786 = vmatpush1.msra.mxu0 0.0
  %787 = vmatprep.subr.mxu0 0.0
  %788 = vmatpush1.msra.mxu0 0.0
  %789 = vmatprep.subr.mxu0 0.0
  %790 = vmatpush1.msra.mxu0 0.0
  %791 = vmatprep.subr.mxu0 0.0
  %792 = vmatpush1.msra.mxu0 0.0
  %793 = vmatprep.subr.mxu0 0.0
  %794 = vmatpush1.msra.mxu0 0.0
  %795 = vmatprep.mubr.f32.mxu0 0.0
  %796 = vmatmul.mubr.f32.gmra.mrb[0].mxu0 %v693
  %v797 = vpop.f32.mrb[0].mxu0
  %v798 = vadd.f32 0.0, %v797
  %v799 = vpop.f32.mrb[0].mxu0
  %800 = vmatprep.mubr.f32.mxu0 0.0
  %801 = vmatmul.mubr.f32.gmra.mrb[0].mxu0 %v696
  %v802 = vpop.f32.mrb[0].mxu0
  %v803 = vadd.f32 0.0, %v802
  %v804 = vpop.f32.mrb[0].mxu0
  %805 = vmatprep.mubr.f32.mxu0 0.0
  %806 = vmatmul.mubr.f32.gmra.mrb[0].mxu0 %v699
  %v807 = vpop.f32.mrb[0].mxu0
  %v808 = vpop.f32.mrb[0].mxu0
  %809 = vmatprep.mubr.f32.mxu0 0.0
  %810 = vmatmul.mubr.f32.gmra.mrb[0].mxu0 %v702
  %v811 = vpop.f32.mrb[0].mxu0
  %v812 = vpop.f32.mrb[0].mxu0
  %813 = vmatprep.mubr.f32.mxu0 0.0
  %814 = vmatmul.mubr.f32.gmra.mrb[0].mxu0 %v705
  %v815 = vpop.f32.mrb[0].mxu0
  %v816 = vpop.f32.mrb[0].mxu0
  %817 = vmatprep.mubr.f32.mxu0 0.0
  %818 = vmatmul.mubr.f32.gmra.mrb[0].mxu0 %v708
  %v819 = vpop.f32.mrb[0].mxu0
  %v820 = vpop.f32.mrb[0].mxu0
  %821 = vmatprep.mubr.f32.mxu0 0.0
  %822 = vmatmul.mubr.f32.gmra.mrb[0].mxu0 %v711
  %v823 = vpop.f32.mrb[0].mxu0
  %v824 = vadd.f32 0.0, %v823
  %v825 = vpop.f32.mrb[0].mxu0
  %826 = vmatprep.mubr.f32.mxu0 0.0
  %827 = vmatmul.mubr.f32.gmra.mrb[0].mxu0 %v714
  %v828 = vpop.f32.mrb[0].mxu0
  %v829 = vadd.f32 0.0, %v828
  %v830 = vpop.f32.mrb[0].mxu0
  %831 = vmatprep.mubr.f32.mxu0 0.0
  %832 = vmatmul.mubr.f32.gmra.mrb[0].mxu0 %v717
  %v833 = vpop.f32.mrb[0].mxu0
  %v834 = vpop.f32.mrb[0].mxu0
  %835 = vmatprep.mubr.f32.mxu0 0.0
  %836 = vmatmul.mubr.f32.gmra.mrb[0].mxu0 %v720
  %v837 = vpop.f32.mrb[0].mxu0
  %v838 = vpop.f32.mrb[0].mxu0
  %839 = vmatprep.mubr.f32.mxu0 0.0
  %840 = vmatmul.mubr.f32.gmra.mrb[0].mxu0 %v723
  %v841 = vpop.f32.mrb[0].mxu0
  %v842 = vpop.f32.mrb[0].mxu0
  %843 = vmatprep.mubr.f32.mxu0 0.0
  %844 = vmatmul.mubr.f32.gmra.mrb[0].mxu0 %v726
  %v845 = vpop.f32.mrb[0].mxu0
  %v846 = vpop.f32.mrb[0].mxu0
  %847 = vdwg.mxu0
  %vm848 = vcmask 64512
  %849 = vst.msk [vmem:[%s3] sm:$0xff] %vm848, %v798
  %vm850 = vcmask 62464
  %851 = vst.msk [vmem:[%s3 + $0x8] sm:$0x3f] %vm850, %v803
  %s852 = scalar_lea.vmem %s3, 48
  %853 = vst.msk [vmem:[%s852] sm:$0xff] %vm848, %v824
  %854 = vst.msk [vmem:[%s852 + $0x8] sm:$0x3f] %vm850, %v829
  %s855 = scalar_lea.vmem %s2, 96
  %v856 = vld [vmem:[%s855] sm:$0xff]
  %v857 = vld [vmem:[%s855 + $0x8] sm:$0xff]
  %v858 = vld [vmem:[%s855 + $0x10] sm:$0xff]
  %v859 = vld [vmem:[%s855 + $0x18] sm:$0xff]
  %v860 = vld [vmem:[%s855 + $0x20] sm:$0xff]
  %v861 = vld [vmem:[%s855 + $0x28] sm:$0xff]
  %v862 = vld [vmem:[%s855 + $0x30] sm:$0xff]
  %v863 = vld [vmem:[%s855 + $0x38] sm:$0xff]
  %v864 = vld [vmem:[%s855 + $0x40] sm:$0xff]
  %v865 = vld [vmem:[%s855 + $0x48] sm:$0xff]
  %v866 = vld [vmem:[%s855 + $0x50] sm:$0xff]
  %v867 = vld [vmem:[%s855 + $0x58] sm:$0x7]
  %v869 = vsel %vm78, %v867, 0
  %871 = vmatprep.subr.mxu0 0.0
  %872 = vmatpush1.msra.mxu0 %v856
  %873 = vmatprep.subr.mxu0 0.0
  %874 = vmatpush1.msra.mxu0 %v857
  %875 = vmatprep.subr.mxu0 0.0
  %876 = vmatpush1.msra.mxu0 %v858
  %877 = vmatprep.subr.mxu0 0.0
  %878 = vmatpush1.msra.mxu0 %v859
  %879 = vmatprep.subr.mxu0 0.0
  %880 = vmatpush1.msra.mxu0 %v860
  %881 = vmatprep.subr.mxu0 0.0
  %882 = vmatpush1.msra.mxu0 %v861
  %883 = vmatprep.subr.mxu0 0.0
  %884 = vmatpush1.msra.mxu0 %v862
  %885 = vmatprep.subr.mxu0 0.0
  %886 = vmatpush1.msra.mxu0 %v863
  %887 = vmatprep.subr.mxu0 0.0
  %888 = vmatpush1.msra.mxu0 %v864
  %889 = vmatprep.subr.mxu0 0.0
  %890 = vmatpush1.msra.mxu0 %v865
  %891 = vmatprep.subr.mxu0 0.0
  %892 = vmatpush1.msra.mxu0 %v866
  %893 = vmatprep.subr.mxu0 0.0
  %894 = vmatpush1.msra.mxu0 %v869
  %895 = vmatprep.subr.mxu0 0.0
  %896 = vmatpush1.msra.mxu0 0.0
  %897 = vmatprep.subr.mxu0 0.0
  %898 = vmatpush1.msra.mxu0 0.0
  %899 = vmatprep.subr.mxu0 0.0
  %900 = vmatpush1.msra.mxu0 0.0
  %901 = vmatprep.subr.mxu0 0.0
  %902 = vmatpush1.msra.mxu0 0.0
  %903 = vmatprep.subr.mxu0 0.0
  %904 = vmatpush1.msra.mxu0 0.0
  %905 = vmatprep.subr.mxu0 0.0
  %906 = vmatpush1.msra.mxu0 0.0
  %907 = vmatprep.subr.mxu0 0.0
  %908 = vmatpush1.msra.mxu0 0.0
  %909 = vmatprep.subr.mxu0 0.0
  %910 = vmatpush1.msra.mxu0 0.0
  %911 = vmatprep.subr.mxu0 0.0
  %912 = vmatpush1.msra.mxu0 0.0
  %913 = vmatprep.subr.mxu0 0.0
  %914 = vmatpush1.msra.mxu0 0.0
  %915 = vmatprep.subr.mxu0 0.0
  %916 = vmatpush1.msra.mxu0 0.0
  %917 = vmatprep.subr.mxu0 0.0
  %918 = vmatpush1.msra.mxu0 0.0
  %919 = vmatprep.subr.mxu0 0.0
  %920 = vmatpush1.msra.mxu0 0.0
  %921 = vmatprep.subr.mxu0 0.0
  %922 = vmatpush1.msra.mxu0 0.0
  %923 = vmatprep.subr.mxu0 0.0
  %924 = vmatpush1.msra.mxu0 0.0
  %925 = vmatprep.subr.mxu0 0.0
  %926 = vmatpush1.msra.mxu0 0.0
  %927 = vmatprep.subr.mxu0 0.0
  %928 = vmatpush1.msra.mxu0 0.0
  %929 = vmatprep.subr.mxu0 0.0
  %930 = vmatpush1.msra.mxu0 0.0
  %931 = vmatprep.subr.mxu0 0.0
  %932 = vmatpush1.msra.mxu0 0.0
  %933 = vmatprep.subr.mxu0 0.0
  %934 = vmatpush1.msra.mxu0 0.0
  %935 = vmatprep.mubr.f32.mxu0 0.0
  %936 = vmatmul.mubr.f32.gmra.mrb[0].mxu0 %v693
  %v937 = vpop.f32.mrb[0].mxu0
  %v938 = vadd.f32 0.0, %v937
  %v939 = vpop.f32.mrb[0].mxu0
  %940 = vmatprep.mubr.f32.mxu0 0.0
  %941 = vmatmul.mubr.f32.gmra.mrb[0].mxu0 %v696
  %v942 = vpop.f32.mrb[0].mxu0
  %v943 = vadd.f32 0.0, %v942
  %v944 = vpop.f32.mrb[0].mxu0
  %945 = vmatprep.mubr.f32.mxu0 0.0
  %946 = vmatmul.mubr.f32.gmra.mrb[0].mxu0 %v699
  %v947 = vpop.f32.mrb[0].mxu0
  %v948 = vpop.f32.mrb[0].mxu0
  %949 = vmatprep.mubr.f32.mxu0 0.0
  %950 = vmatmul.mubr.f32.gmra.mrb[0].mxu0 %v702
  %v951 = vpop.f32.mrb[0].mxu0
  %v952 = vpop.f32.mrb[0].mxu0
  %953 = vmatprep.mubr.f32.mxu0 0.0
  %954 = vmatmul.mubr.f32.gmra.mrb[0].mxu0 %v705
  %v955 = vpop.f32.mrb[0].mxu0
  %v956 = vpop.f32.mrb[0].mxu0
  %957 = vmatprep.mubr.f32.mxu0 0.0
  %958 = vmatmul.mubr.f32.gmra.mrb[0].mxu0 %v708
  %v959 = vpop.f32.mrb[0].mxu0
  %v960 = vpop.f32.mrb[0].mxu0
  %961 = vmatprep.mubr.f32.mxu0 0.0
  %962 = vmatmul.mubr.f32.gmra.mrb[0].mxu0 %v711
  %v963 = vpop.f32.mrb[0].mxu0
  %v964 = vadd.f32 0.0, %v963
  %v965 = vpop.f32.mrb[0].mxu0
  %966 = vmatprep.mubr.f32.mxu0 0.0
  %967 = vmatmul.mubr.f32.gmra.mrb[0].mxu0 %v714
  %v968 = vpop.f32.mrb[0].mxu0
  %v969 = vadd.f32 0.0, %v968
  %v970 = vpop.f32.mrb[0].mxu0
  %971 = vmatprep.mubr.f32.mxu0 0.0
  %972 = vmatmul.mubr.f32.gmra.mrb[0].mxu0 %v717
  %v973 = vpop.f32.mrb[0].mxu0
  %v974 = vpop.f32.mrb[0].mxu0
  %975 = vmatprep.mubr.f32.mxu0 0.0
  %976 = vmatmul.mubr.f32.gmra.mrb[0].mxu0 %v720
  %v977 = vpop.f32.mrb[0].mxu0
  %v978 = vpop.f32.mrb[0].mxu0
  %979 = vmatprep.mubr.f32.mxu0 0.0
  %980 = vmatmul.mubr.f32.gmra.mrb[0].mxu0 %v723
  %v981 = vpop.f32.mrb[0].mxu0
  %v982 = vpop.f32.mrb[0].mxu0
  %983 = vmatprep.mubr.f32.mxu0 0.0
  %984 = vmatmul.mubr.f32.gmra.mrb[0].mxu0 %v726
  %v985 = vpop.f32.mrb[0].mxu0
  %v986 = vpop.f32.mrb[0].mxu0
  %987 = vdwg.mxu0
  %s988 = scalar_lea.vmem %s3, 16
  %989 = vst.msk [vmem:[%s988] sm:$0xff] %vm848, %v938
  %990 = vst.msk [vmem:[%s988 + $0x8] sm:$0x3f] %vm850, %v943
  %s991 = scalar_lea.vmem %s3, 64
  %992 = vst.msk [vmem:[%s991] sm:$0xff] %vm848, %v964
  %993 = vst.msk [vmem:[%s991 + $0x8] sm:$0x3f] %vm850, %v969
  %s994 = scalar_lea.vmem %s2, 192
  %v995 = vld [vmem:[%s994] sm:$0xff]
  %v996 = vld [vmem:[%s994 + $0x8] sm:$0xff]
  %v997 = vld [vmem:[%s994 + $0x10] sm:$0xff]
  %v998 = vld [vmem:[%s994 + $0x18] sm:$0xff]
  %v999 = vld [vmem:[%s994 + $0x20] sm:$0xff]
  %v1000 = vld [vmem:[%s994 + $0x28] sm:$0xff]
  %v1001 = vld [vmem:[%s994 + $0x30] sm:$0xff]
  %v1002 = vld [vmem:[%s994 + $0x38] sm:$0xff]
  %v1003 = vld [vmem:[%s994 + $0x40] sm:$0xff]
  %v1004 = vld [vmem:[%s994 + $0x48] sm:$0xff]
  %v1005 = vld [vmem:[%s994 + $0x50] sm:$0xff]
  %v1006 = vld [vmem:[%s994 + $0x58] sm:$0x7]
  %v1008 = vsel %vm78, %v1006, 0
  %1010 = vmatprep.subr.mxu0 0.0
  %1011 = vmatpush1.msra.mxu0 %v995
  %1012 = vmatprep.subr.mxu0 0.0
  %1013 = vmatpush1.msra.mxu0 %v996
  %1014 = vmatprep.subr.mxu0 0.0
  %1015 = vmatpush1.msra.mxu0 %v997
  %1016 = vmatprep.subr.mxu0 0.0
  %1017 = vmatpush1.msra.mxu0 %v998
  %1018 = vmatprep.subr.mxu0 0.0
  %1019 = vmatpush1.msra.mxu0 %v999
  %1020 = vmatprep.subr.mxu0 0.0
  %1021 = vmatpush1.msra.mxu0 %v1000
  %1022 = vmatprep.subr.mxu0 0.0
  %1023 = vmatpush1.msra.mxu0 %v1001
  %1024 = vmatprep.subr.mxu0 0.0
  %1025 = vmatpush1.msra.mxu0 %v1002
  %1026 = vmatprep.subr.mxu0 0.0
  %1027 = vmatpush1.msra.mxu0 %v1003
  %1028 = vmatprep.subr.mxu0 0.0
  %1029 = vmatpush1.msra.mxu0 %v1004
  %1030 = vmatprep.subr.mxu0 0.0
  %1031 = vmatpush1.msra.mxu0 %v1005
  %1032 = vmatprep.subr.mxu0 0.0
  %1033 = vmatpush1.msra.mxu0 %v1008
  %1034 = vmatprep.subr.mxu0 0.0
  %1035 = vmatpush1.msra.mxu0 0.0
  %1036 = vmatprep.subr.mxu0 0.0
  %1037 = vmatpush1.msra.mxu0 0.0
  %1038 = vmatprep.subr.mxu0 0.0
  %1039 = vmatpush1.msra.mxu0 0.0
  %1040 = vmatprep.subr.mxu0 0.0
  %1041 = vmatpush1.msra.mxu0 0.0
  %1042 = vmatprep.subr.mxu0 0.0
  %1043 = vmatpush1.msra.mxu0 0.0
  %1044 = vmatprep.subr.mxu0 0.0
  %1045 = vmatpush1.msra.mxu0 0.0
  %1046 = vmatprep.subr.mxu0 0.0
  %1047 = vmatpush1.msra.mxu0 0.0
  %1048 = vmatprep.subr.mxu0 0.0
  %1049 = vmatpush1.msra.mxu0 0.0
  %1050 = vmatprep.subr.mxu0 0.0
  %1051 = vmatpush1.msra.mxu0 0.0
  %1052 = vmatprep.subr.mxu0 0.0
  %1053 = vmatpush1.msra.mxu0 0.0
  %1054 = vmatprep.subr.mxu0 0.0
  %1055 = vmatpush1.msra.mxu0 0.0
  %1056 = vmatprep.subr.mxu0 0.0
  %1057 = vmatpush1.msra.mxu0 0.0
  %1058 = vmatprep.subr.mxu0 0.0
  %1059 = vmatpush1.msra.mxu0 0.0
  %1060 = vmatprep.subr.mxu0 0.0
  %1061 = vmatpush1.msra.mxu0 0.0
  %1062 = vmatprep.subr.mxu0 0.0
  %1063 = vmatpush1.msra.mxu0 0.0
  %1064 = vmatprep.subr.mxu0 0.0
  %1065 = vmatpush1.msra.mxu0 0.0
  %1066 = vmatprep.subr.mxu0 0.0
  %1067 = vmatpush1.msra.mxu0 0.0
  %1068 = vmatprep.subr.mxu0 0.0
  %1069 = vmatpush1.msra.mxu0 0.0
  %1070 = vmatprep.subr.mxu0 0.0
  %1071 = vmatpush1.msra.mxu0 0.0
  %1072 = vmatprep.subr.mxu0 0.0
  %1073 = vmatpush1.msra.mxu0 0.0
  %1074 = vmatprep.mubr.f32.mxu0 0.0
  %1075 = vmatmul.mubr.f32.gmra.mrb[0].mxu0 %v693
  %v1076 = vpop.f32.mrb[0].mxu0
  %v1077 = vadd.f32 0.0, %v1076
  %v1078 = vpop.f32.mrb[0].mxu0
  %1079 = vmatprep.mubr.f32.mxu0 0.0
  %1080 = vmatmul.mubr.f32.gmra.mrb[0].mxu0 %v696
  %v1081 = vpop.f32.mrb[0].mxu0
  %v1082 = vadd.f32 0.0, %v1081
  %v1083 = vpop.f32.mrb[0].mxu0
  %1084 = vmatprep.mubr.f32.mxu0 0.0
  %1085 = vmatmul.mubr.f32.gmra.mrb[0].mxu0 %v699
  %v1086 = vpop.f32.mrb[0].mxu0
  %v1087 = vpop.f32.mrb[0].mxu0
  %1088 = vmatprep.mubr.f32.mxu0 0.0
  %1089 = vmatmul.mubr.f32.gmra.mrb[0].mxu0 %v702
  %v1090 = vpop.f32.mrb[0].mxu0
  %v1091 = vpop.f32.mrb[0].mxu0
  %1092 = vmatprep.mubr.f32.mxu0 0.0
  %1093 = vmatmul.mubr.f32.gmra.mrb[0].mxu0 %v705
  %v1094 = vpop.f32.mrb[0].mxu0
  %v1095 = vpop.f32.mrb[0].mxu0
  %1096 = vmatprep.mubr.f32.mxu0 0.0
  %1097 = vmatmul.mubr.f32.gmra.mrb[0].mxu0 %v708
  %v1098 = vpop.f32.mrb[0].mxu0
  %v1099 = vpop.f32.mrb[0].mxu0
  %1100 = vmatprep.mubr.f32.mxu0 0.0
  %1101 = vmatmul.mubr.f32.gmra.mrb[0].mxu0 %v711
  %v1102 = vpop.f32.mrb[0].mxu0
  %v1103 = vadd.f32 0.0, %v1102
  %v1104 = vpop.f32.mrb[0].mxu0
  %1105 = vmatprep.mubr.f32.mxu0 0.0
  %1106 = vmatmul.mubr.f32.gmra.mrb[0].mxu0 %v714
  %v1107 = vpop.f32.mrb[0].mxu0
  %v1108 = vadd.f32 0.0, %v1107
  %v1109 = vpop.f32.mrb[0].mxu0
  %1110 = vmatprep.mubr.f32.mxu0 0.0
  %1111 = vmatmul.mubr.f32.gmra.mrb[0].mxu0 %v717
  %v1112 = vpop.f32.mrb[0].mxu0
  %v1113 = vpop.f32.mrb[0].mxu0
  %1114 = vmatprep.mubr.f32.mxu0 0.0
  %1115 = vmatmul.mubr.f32.gmra.mrb[0].mxu0 %v720
  %v1116 = vpop.f32.mrb[0].mxu0
  %v1117 = vpop.f32.mrb[0].mxu0
  %1118 = vmatprep.mubr.f32.mxu0 0.0
  %1119 = vmatmul.mubr.f32.gmra.mrb[0].mxu0 %v723
  %v1120 = vpop.f32.mrb[0].mxu0
  %v1121 = vpop.f32.mrb[0].mxu0
  %1122 = vmatprep.mubr.f32.mxu0 0.0
  %1123 = vmatmul.mubr.f32.gmra.mrb[0].mxu0 %v726
  %v1124 = vpop.f32.mrb[0].mxu0
  %v1125 = vpop.f32.mrb[0].mxu0
  %1126 = vdwg.mxu0
  %s1127 = scalar_lea.vmem %s3, 32
  %1128 = vst.msk [vmem:[%s1127] sm:$0xff] %vm848, %v1077
  %1129 = vst.msk [vmem:[%s1127 + $0x8] sm:$0x3f] %vm850, %v1082
  %s1130 = scalar_lea.vmem %s3, 80
  %1131 = vst.msk [vmem:[%s1130] sm:$0xff] %vm848, %v1103
  %1132 = vst.msk [vmem:[%s1130 + $0x8] sm:$0x3f] %vm850, %v1108
  // Predicated region
  $region14: #{tpu_custom_call.1} parent=0 // pred_check
    _
  $region15: #{tpu_custom_call.1} parent=0 // pred_check_branch
    %1134 = sbr.rel (0) target = $region17
  $region16: #{tpu_custom_call.1} parent=0 // pred_region
    _
  $region17: #{tpu_custom_call.1} parent=0 // pred_fallthru
    _
  // Predicated region
  $region18: #{tpu_custom_call.1} parent=0 // pred_check
    _
  $region19: #{tpu_custom_call.1} parent=0 // pred_check_branch
    %1136 = sbr.rel (0) target = $region21
  $region20: #{tpu_custom_call.1} parent=0 // pred_region
    _
  $region21: #{tpu_custom_call.1} parent=0 // pred_fallthru
    _

</llo_original>
